<compile_context>
chip_gen: v7x
topology: tpu7x:2x2x1
jax: 0.10.0
libtpu: 0.0.40
codegen_flags: <defaults>
</compile_context>

<pallas_src>
import functools
import random as pyrandom

import numpy as np
import jax
import jax.numpy as jnp
from jax import lax
from jax.experimental import pallas as pl
from jax.experimental.pallas import tpu as pltpu


_TARGET_BLOCK_BYTES = 2 * 1024 * 1024   # ~2 MB per grid step (85%+ of HBM roofline)
_MAX_IMG_BYTES = 4 * 1024 * 1024        # beyond this, fall back (see TODO above)


# ---------------------------------------------------------------------------
# Kernel
# ---------------------------------------------------------------------------
def _rand_copy_kernel(offs_ref, x_ref, o_ref, *, num_copies, img_h, szx, szy):
    """offs_ref: SMEM int32[num_copies*4] = [stx1, sty1, row_shift, col_shift]
    per copy, where row_shift = (stx1-stx2) mod R and col_shift = (sty1-sty2) mod W.

    x_ref / o_ref: (R, W) VMEM block, R = images_per_block * C * H (whole images).
    """
    R, W = x_ref.shape
    y = x_ref[...]

    # Loop-invariant position maps (hoisted out of the per-copy loop).
    row_in_img = lax.broadcasted_iota(jnp.int32, (R, 1), 0) % img_h   # H-row inside its plane
    col = lax.broadcasted_iota(jnp.int32, (1, W), 1)                  # lane / column index

    for i in range(num_copies):
        stx1 = offs_ref[4 * i + 0]    # dst row start (inside the image plane)
        sty1 = offs_ref[4 * i + 1]    # dst col start
        rsh = offs_ref[4 * i + 2]     # (stx1 - stx2) mod R
        csh = offs_ref[4 * i + 3]     # (sty1 - sty2) mod W

        # Align source data with its destination position; inside the destination
        # window the shift never wraps, so shifted[r, j] == y[src_row, src_col].
        shifted = pltpu.roll(pltpu.roll(y, csh, 1), rsh, 0)

        row_ok = (row_in_img >= stx1) & (row_in_img < stx1 + szx)     # (R, 1)
        col_ok = (col >= sty1) & (col < sty1 + szy)                   # (1, W)
        y = jnp.where(row_ok & col_ok, shifted, y)                    # copy i+1 sees copy i

    o_ref[...] = y


# ---------------------------------------------------------------------------
# Wrappers
# ---------------------------------------------------------------------------
def _pick_images_per_block(batch, img_bytes):
    """Pack images per grid step to ~_TARGET_BLOCK_BYTES, keep >=2 blocks for megacore."""
    tb = max(1, min(batch, _TARGET_BLOCK_BYTES // max(img_bytes, 1)))
    while batch % tb:
        tb -= 1
    if batch >= 2 and batch // tb < 2:      # v7x: give both TensorCores work
        tb2 = max(1, batch // 2)
        while batch % tb2:
            tb2 -= 1
        tb = tb2
    return tb


def _pallas_supported(x_nchw):
    B, C, H, W = x_nchw.shape
    itemsize = x_nchw.dtype.itemsize
    img_bytes = C * H * W * itemsize
    return (itemsize == 4                   # 32-bit native layout for the rolls
            and W % 128 == 0                # lane-dense, aligned rotate operands
            and (C * H) % 8 == 0            # sublane-aligned flattened blocks
            and img_bytes <= _MAX_IMG_BYTES)


def _apply_copies_pallas(x_nchw, offsets, szx, szy):
    """Apply all patch copies in one fused Pallas kernel (flattened rows, grid over B)."""
    B, C, H, W = x_nchw.shape
    itemsize = x_nchw.dtype.itemsize
    img_bytes = C * H * W * itemsize
    tb = _pick_images_per_block(B, img_bytes)
    rows_per_block = tb * C * H
    block_bytes = rows_per_block * W * itemsize

    num = len(offsets)
    offs = np.empty((num, 4), dtype=np.int32)
    for i, (stx1, sty1, stx2, sty2) in enumerate(offsets):
        offs[i] = (stx1, sty1,
                   (stx1 - stx2) % rows_per_block,
                   (sty1 - sty2) % W)
    offs_flat = jnp.asarray(offs.reshape(-1))

    xf = x_nchw.reshape(B * C * H, W)       # free metadata reshape (NCHW contiguous)
    kernel = functools.partial(_rand_copy_kernel, num_copies=num,
                               img_h=H, szx=szx, szy=szy)
    # Leave headroom: ~2x double-buffered in/out blocks + per-copy temporaries.
    vmem_limit = int(min(60 * 1024 * 1024, max(32 * 1024 * 1024, 10 * block_bytes)))

    out = pl.pallas_call(
        kernel,
        out_shape=jax.ShapeDtypeStruct((B * C * H, W), x_nchw.dtype),
        grid_spec=pltpu.PrefetchScalarGridSpec(
            num_scalar_prefetch=1,                    # offsets land in SMEM
            grid=(B // tb,),
            in_specs=[pl.BlockSpec((rows_per_block, W), lambda b, offs: (b, 0))],
            out_specs=pl.BlockSpec((rows_per_block, W), lambda b, offs: (b, 0)),
        ),
        compiler_params=pltpu.CompilerParams(
            dimension_semantics=("parallel",),        # independent per batch block
            vmem_limit_bytes=vmem_limit,
        ),
    )(offs_flat, xf)
    return out.reshape(B, C, H, W)


def _apply_copies_xla(x_nchw, offsets, szx, szy):
    """Plain-XLA path for shapes the kernel does not target (tiny/unaligned W, etc.)."""
    y = x_nchw
    for stx1, sty1, stx2, sty2 in offsets:
        patch = y[:, :, stx2:stx2 + szx, sty2:sty2 + szy]
        y = y.at[:, :, stx1:stx1 + szx, sty1:sty1 + szy].set(patch)
    return y


def _draw_params(seed, pct, max_num, H, W):
    """Host-side RNG draws, mirroring the torch reference's draw order."""
    rng = pyrandom.Random(seed)
    szx, szy = int(pct * H), int(pct * W)
    num = rng.randint(0, max_num)   # inclusive, as in the reference
    offsets = []
    for _ in range(num):
        stx1 = int(rng.random() * (1 - pct) * H)
        sty1 = int(rng.random() * (1 - pct) * W)
        stx2 = int(rng.random() * (1 - pct) * H)
        sty2 = int(rng.random() * (1 - pct) * W)
        offsets.append((stx1, sty1, stx2, sty2))
    return szx, szy, offsets


def rand_copy_pallas(x_nchw, pct=0.2, max_num=4, seed=0):
    """JAX/Pallas equivalent of rand_copy(x, pct, max_num) on an NCHW tensor."""
    B, C, H, W = x_nchw.shape
    szx, szy, offsets = _draw_params(seed, pct, max_num, H, W)
    if szx <= 0 or szy <= 0 or not offsets:
        return x_nchw
    if _pallas_supported(x_nchw):
        return _apply_copies_pallas(x_nchw, offsets, szx, szy)
    return _apply_copies_xla(x_nchw, offsets, szx, szy)


class RandCopy:
    """Mirror of the PyTorch module (no parameters); host RNG drawn per call."""

    def __init__(self, pct=0.2, max_num=4, seed=0):
        self.pct, self.max_num, self.seed = pct, max_num, seed

    def __call__(self, x_nchw):
        return rand_copy_pallas(x_nchw, self.pct, self.max_num, self.seed)


def _ref_rand_copy_np(x_np, offsets, szx, szy):
    y = x_np.copy()
    for stx1, sty1, stx2, sty2 in offsets:
        patch = y[:, :, stx2:stx2 + szx, sty2:sty2 + szy].copy()
        y[:, :, stx1:stx1 + szx, sty1:sty1 + szy] = patch
    return y


if __name__ == "__main__":
    key = jax.random.PRNGKey(0)
    # W kept lane-dense (multiple of 128) so the Pallas path is exercised; per the
    # review, sub-128 widths cannot approach roofline and take the XLA path below.
    B, C, H, W = 2, 4, 16, 128
    x = jax.random.normal(key, (B, C, H, W), dtype=jnp.float32)

    pct, max_num, seed = 0.2, 4, 0
    szx, szy = int(pct * H), int(pct * W)     # 3, 25

    # --- fused multi-copy kernel with fixed, partially overlapping offsets ---
    offsets = [(1, 17, 9, 63), (0, 90, 2, 5), (10, 40, 3, 33), (4, 4, 5, 5)]
    y = jax.block_until_ready(_apply_copies_pallas(x, offsets, szx, szy))
    y_ref = _ref_rand_copy_np(np.asarray(x), offsets, szx, szy)
    np.testing.assert_array_equal(np.asarray(y), y_ref)

    # --- full module forward (host-RNG number / locations of patch copies) ---
    mod = RandCopy(pct=pct, max_num=max_num, seed=seed)
    out = jax.block_until_ready(mod(x))
    assert out.shape == (B, C, H, W) and out.dtype == x.dtype
    _, _, offs_mod = _draw_params(seed, pct, max_num, H, W)
    out_ref = _ref_rand_copy_np(np.asarray(x), offs_mod, szx, szy)
    np.testing.assert_array_equal(np.asarray(out), out_ref)

    # --- plain-XLA fallback path for shapes the kernel does not target (W=16) ---
    xs = jax.random.normal(key, (1, 3, 16, 16), dtype=jnp.float32)
    outs = jax.block_until_ready(RandCopy(pct, max_num, seed=1)(xs))
    szx_s, szy_s, offs_s = _draw_params(1, pct, max_num, 16, 16)
    ref_s = _ref_rand_copy_np(np.asarray(xs), offs_s, szx_s, szy_s)
    np.testing.assert_array_equal(np.asarray(outs), ref_s)

    print("KERNEL_OK")
</pallas_src>

<mosaic_0001>
module attributes {stable_mosaic.version = 11 : i64} {
  func.func @_rand_copy_kernel(%arg0: i32, %arg1: memref<16xi32, #tpu.memory_space<smem>>, %arg2: memref<64x128xf32, #tpu.memory_space<vmem>>, %arg3: memref<64x128xf32, #tpu.memory_space<vmem>>) attributes {dimension_semantics = [#tpu.dimension_semantics<parallel>], iteration_bounds = array<i64: 2>, scalar_prefetch = 1 : i64, scratch_operands = 0 : i64, tpu.core_type = #tpu.core_type<tc>, window_params = [{transform_indices = @transform_0, window_bounds = array<i64: 64, 128>}, {transform_indices = @transform_1, window_bounds = array<i64: 64, 128>}]} {
    %c0 = arith.constant 0 : index
    %c0_0 = arith.constant 0 : index
    %0 = vector.load %arg2[%c0, %c0_0] : memref<64x128xf32, #tpu.memory_space<vmem>>, vector<64x128xf32>
    %1 = tpu.iota {dimensions = array<i32: 0>} : vector<64x1xi32>
    %c16_i32 = arith.constant 16 : i32
    %c0_i32 = arith.constant 0 : i32
    %2 = arith.cmpi eq, %c16_i32, %c0_i32 : i32
    %c1_i32 = arith.constant 1 : i32
    %3 = arith.select %2, %c1_i32, %c16_i32 : i32
    %4 = vector.broadcast %3 : i32 to vector<64x1xi32>
    %5 = arith.remsi %1, %4 : vector<64x1xi32>
    %c0_i32_1 = arith.constant 0 : i32
    %6 = vector.broadcast %c0_i32_1 : i32 to vector<64x1xi32>
    %7 = arith.cmpi ne, %5, %6 : vector<64x1xi32>
    %c0_i32_2 = arith.constant 0 : i32
    %8 = vector.broadcast %c0_i32_2 : i32 to vector<64x1xi32>
    %9 = arith.cmpi slt, %5, %8 : vector<64x1xi32>
    %c0_i32_3 = arith.constant 0 : i32
    %10 = arith.cmpi slt, %3, %c0_i32_3 : i32
    %11 = vector.broadcast %10 : i1 to vector<64x1xi1>
    %12 = vector.broadcast %11 : vector<64x1xi1> to vector<64x1xi1>
    %13 = arith.xori %9, %12 : vector<64x1xi1>
    %14 = arith.andi %13, %7 : vector<64x1xi1>
    %15 = vector.broadcast %3 : i32 to vector<64x1xi32>
    %16 = arith.addi %5, %15 : vector<64x1xi32>
    %17 = arith.select %14, %16, %5 : vector<64x1xi1>, vector<64x1xi32>
    %18 = tpu.iota {dimensions = array<i32: 1>} : vector<1x128xi32>
    %c0_4 = arith.constant 0 : index
    %19 = memref.load %arg1[%c0_4] : memref<16xi32, #tpu.memory_space<smem>>
    %c1 = arith.constant 1 : index
    %20 = memref.load %arg1[%c1] : memref<16xi32, #tpu.memory_space<smem>>
    %c2 = arith.constant 2 : index
    %21 = memref.load %arg1[%c2] : memref<16xi32, #tpu.memory_space<smem>>
    %c3 = arith.constant 3 : index
    %22 = memref.load %arg1[%c3] : memref<16xi32, #tpu.memory_space<smem>>
    %23 = tpu.dynamic_rotate %0 by %22 dim 1 : vector<64x128xf32>, i32 -> vector<64x128xf32>
    %24 = tpu.dynamic_rotate %23 by %21 dim 0 : vector<64x128xf32>, i32 -> vector<64x128xf32>
    %25 = vector.broadcast %19 : i32 to vector<64x1xi32>
    %26 = arith.cmpi sge, %17, %25 : vector<64x1xi32>
    %c3_i32 = arith.constant 3 : i32
    %27 = arith.addi %19, %c3_i32 : i32
    %28 = vector.broadcast %27 : i32 to vector<64x1xi32>
    %29 = arith.cmpi slt, %17, %28 : vector<64x1xi32>
    %30 = arith.andi %26, %29 : vector<64x1xi1>
    %31 = vector.broadcast %20 : i32 to vector<1x128xi32>
    %32 = arith.cmpi sge, %18, %31 : vector<1x128xi32>
    %c25_i32 = arith.constant 25 : i32
    %33 = arith.addi %20, %c25_i32 : i32
    %34 = vector.broadcast %33 : i32 to vector<1x128xi32>
    %35 = arith.cmpi slt, %18, %34 : vector<1x128xi32>
    %36 = arith.andi %32, %35 : vector<1x128xi1>
    %37 = vector.broadcast %30 : vector<64x1xi1> to vector<64x128xi1>
    %38 = vector.broadcast %36 : vector<1x128xi1> to vector<64x128xi1>
    %39 = arith.andi %37, %38 : vector<64x128xi1>
    %40 = arith.select %39, %24, %0 : vector<64x128xi1>, vector<64x128xf32>
    %c4 = arith.constant 4 : index
    %41 = memref.load %arg1[%c4] : memref<16xi32, #tpu.memory_space<smem>>
    %c5 = arith.constant 5 : index
    %42 = memref.load %arg1[%c5] : memref<16xi32, #tpu.memory_space<smem>>
    %c6 = arith.constant 6 : index
    %43 = memref.load %arg1[%c6] : memref<16xi32, #tpu.memory_space<smem>>
    %c7 = arith.constant 7 : index
    %44 = memref.load %arg1[%c7] : memref<16xi32, #tpu.memory_space<smem>>
    %45 = tpu.dynamic_rotate %40 by %44 dim 1 : vector<64x128xf32>, i32 -> vector<64x128xf32>
    %46 = tpu.dynamic_rotate %45 by %43 dim 0 : vector<64x128xf32>, i32 -> vector<64x128xf32>
    %47 = vector.broadcast %41 : i32 to vector<64x1xi32>
    %48 = arith.cmpi sge, %17, %47 : vector<64x1xi32>
    %c3_i32_5 = arith.constant 3 : i32
    %49 = arith.addi %41, %c3_i32_5 : i32
    %50 = vector.broadcast %49 : i32 to vector<64x1xi32>
    %51 = arith.cmpi slt, %17, %50 : vector<64x1xi32>
    %52 = arith.andi %48, %51 : vector<64x1xi1>
    %53 = vector.broadcast %42 : i32 to vector<1x128xi32>
    %54 = arith.cmpi sge, %18, %53 : vector<1x128xi32>
    %c25_i32_6 = arith.constant 25 : i32
    %55 = arith.addi %42, %c25_i32_6 : i32
    %56 = vector.broadcast %55 : i32 to vector<1x128xi32>
    %57 = arith.cmpi slt, %18, %56 : vector<1x128xi32>
    %58 = arith.andi %54, %57 : vector<1x128xi1>
    %59 = vector.broadcast %52 : vector<64x1xi1> to vector<64x128xi1>
    %60 = vector.broadcast %58 : vector<1x128xi1> to vector<64x128xi1>
    %61 = arith.andi %59, %60 : vector<64x128xi1>
    %62 = arith.select %61, %46, %40 : vector<64x128xi1>, vector<64x128xf32>
    %c8 = arith.constant 8 : index
    %63 = memref.load %arg1[%c8] : memref<16xi32, #tpu.memory_space<smem>>
    %c9 = arith.constant 9 : index
    %64 = memref.load %arg1[%c9] : memref<16xi32, #tpu.memory_space<smem>>
    %c10 = arith.constant 10 : index
    %65 = memref.load %arg1[%c10] : memref<16xi32, #tpu.memory_space<smem>>
    %c11 = arith.constant 11 : index
    %66 = memref.load %arg1[%c11] : memref<16xi32, #tpu.memory_space<smem>>
    %67 = tpu.dynamic_rotate %62 by %66 dim 1 : vector<64x128xf32>, i32 -> vector<64x128xf32>
    %68 = tpu.dynamic_rotate %67 by %65 dim 0 : vector<64x128xf32>, i32 -> vector<64x128xf32>
    %69 = vector.broadcast %63 : i32 to vector<64x1xi32>
    %70 = arith.cmpi sge, %17, %69 : vector<64x1xi32>
    %c3_i32_7 = arith.constant 3 : i32
    %71 = arith.addi %63, %c3_i32_7 : i32
    %72 = vector.broadcast %71 : i32 to vector<64x1xi32>
    %73 = arith.cmpi slt, %17, %72 : vector<64x1xi32>
    %74 = arith.andi %70, %73 : vector<64x1xi1>
    %75 = vector.broadcast %64 : i32 to vector<1x128xi32>
    %76 = arith.cmpi sge, %18, %75 : vector<1x128xi32>
    %c25_i32_8 = arith.constant 25 : i32
    %77 = arith.addi %64, %c25_i32_8 : i32
    %78 = vector.broadcast %77 : i32 to vector<1x128xi32>
    %79 = arith.cmpi slt, %18, %78 : vector<1x128xi32>
    %80 = arith.andi %76, %79 : vector<1x128xi1>
    %81 = vector.broadcast %74 : vector<64x1xi1> to vector<64x128xi1>
    %82 = vector.broadcast %80 : vector<1x128xi1> to vector<64x128xi1>
    %83 = arith.andi %81, %82 : vector<64x128xi1>
    %84 = arith.select %83, %68, %62 : vector<64x128xi1>, vector<64x128xf32>
    %c12 = arith.constant 12 : index
    %85 = memref.load %arg1[%c12] : memref<16xi32, #tpu.memory_space<smem>>
    %c13 = arith.constant 13 : index
    %86 = memref.load %arg1[%c13] : memref<16xi32, #tpu.memory_space<smem>>
    %c14 = arith.constant 14 : index
    %87 = memref.load %arg1[%c14] : memref<16xi32, #tpu.memory_space<smem>>
    %c15 = arith.constant 15 : index
    %88 = memref.load %arg1[%c15] : memref<16xi32, #tpu.memory_space<smem>>
    %89 = tpu.dynamic_rotate %84 by %88 dim 1 : vector<64x128xf32>, i32 -> vector<64x128xf32>
    %90 = tpu.dynamic_rotate %89 by %87 dim 0 : vector<64x128xf32>, i32 -> vector<64x128xf32>
    %91 = vector.broadcast %85 : i32 to vector<64x1xi32>
    %92 = arith.cmpi sge, %17, %91 : vector<64x1xi32>
    %c3_i32_9 = arith.constant 3 : i32
    %93 = arith.addi %85, %c3_i32_9 : i32
    %94 = vector.broadcast %93 : i32 to vector<64x1xi32>
    %95 = arith.cmpi slt, %17, %94 : vector<64x1xi32>
    %96 = arith.andi %92, %95 : vector<64x1xi1>
    %97 = vector.broadcast %86 : i32 to vector<1x128xi32>
    %98 = arith.cmpi sge, %18, %97 : vector<1x128xi32>
    %c25_i32_10 = arith.constant 25 : i32
    %99 = arith.addi %86, %c25_i32_10 : i32
    %100 = vector.broadcast %99 : i32 to vector<1x128xi32>
    %101 = arith.cmpi slt, %18, %100 : vector<1x128xi32>
    %102 = arith.andi %98, %101 : vector<1x128xi1>
    %103 = vector.broadcast %96 : vector<64x1xi1> to vector<64x128xi1>
    %104 = vector.broadcast %102 : vector<1x128xi1> to vector<64x128xi1>
    %105 = arith.andi %103, %104 : vector<64x128xi1>
    %106 = arith.select %105, %90, %84 : vector<64x128xi1>, vector<64x128xf32>
    %c0_11 = arith.constant 0 : index
    %c0_12 = arith.constant 0 : index
    %107 = vector.load %arg3[%c0_11, %c0_12] : memref<64x128xf32, #tpu.memory_space<vmem>>, vector<64x128xf32>
    tpu.vector_store %arg3[%c0_11, %c0_12], %106 {strides = array<i32>} : memref<64x128xf32, #tpu.memory_space<vmem>>, vector<64x128xf32>,
    return
  }
  func.func @transform_0(%arg0: i32, %arg1: memref<16xi32, #tpu.memory_space<smem>>) -> (i32, i32) {
    %c0_i32 = arith.constant 0 : i32
    %c0_i32_0 = arith.constant 0 : i32
    return %arg0, %c0_i32 : i32, i32
  }
  func.func @transform_1(%arg0: i32, %arg1: memref<16xi32, #tpu.memory_space<smem>>) -> (i32, i32) {
    %c0_i32 = arith.constant 0 : i32
    %c0_i32_0 = arith.constant 0 : i32
    return %arg0, %c0_i32 : i32, i32
  }
}

</mosaic_0001>

<llo_original>
// kernel: tpu_custom_call.1
$region0: #{tpu_custom_call.1}
  #allocation0 [shape = 'u32[]', space=smem, size = 0x4, offset = 0x4, fixed_abs, tag = 'smem constant byte address 0x4 - core index']
  #allocation1 [shape = 'u32[144,128]{1,0:T(1,128)}', space=vmem, size = 0x12000, scoped, tag = 'internal scratch']
  #allocation2 [shape = 's32[1]{0}', space=sflag, size = 0x4, scoped, tag = 'scoped memory for tpu_custom_call.1']
  #allocation3 [shape = 'u8[512]{0}', space=smem, size = 0x200, scoped, tag = 'prefetched SMEM operand 0']
  %s0 = inlined_call_operand.hbm [shape: s32[16], index: 0, kind: input, shape index: {}]
  %s1 = inlined_call_operand.hbm [shape: f32[128,128], index: 1, kind: input, shape index: {}]
  %s2 = inlined_call_operand.hbm [shape: f32[128,128], index: 2, kind: output, shape index: {}]
  %s3 = sld [smem:[#allocation0]]
  $region41: #{tpu_custom_call.1} parent=0
    _
  %s5 = ssub.s32 1, %s3
  %s6 = scalar_select 0, %s5, %s3
  %8 = dma.hbm_to_smem %s0, 16, [#allocation3], [#allocation2]
  %9 = dma.done [#allocation2], 16
  %10 = sfence
  $region1: #{tpu_custom_call.1} parent=0
    #allocation4 [shape = 'u8[65536]{0}', space=vmem, size = 0x10000, scoped, tag = 'input window, operand 1']
    #allocation5 [shape = 's32[2]{0}', space=sflag, size = 0x8, scoped, tag = 'scoped memory for tpu_custom_call.1']
    #allocation6 [shape = 's32[2]{0}', space=sflag, size = 0x8, scoped, tag = 'scoped memory for tpu_custom_call.1']
    #allocation7 [shape = 'u8[65536]{0}', space=vmem, size = 0x10000, scoped, tag = 'output window, operand 0']
    %11 = vsyncpa [#allocation5], 0
    %s12 = scalar_lea.sflag [#allocation5], 1
    %13 = vsyncpa %s12, 0
    %14 = vsyncpa [#allocation6], 0
    %s15 = scalar_lea.sflag [#allocation6], 1
    %16 = vsyncpa %s15, 0
    loop: start=0, step=1, limit=4
    $region2: #{tpu_custom_call.1} parent=1 // loop_pre_header
      _
    $region3: #{tpu_custom_call.1} parent=1 // loop_header
      %s18 = sphi 0, %s22
      %p19 = scmp.ge.s32.totalorder %s18, 4
      %s28 = sphi 0, %s30
      %s31 = sphi 0, %s28
      %s32 = sphi 0, %s31
      %s48 = sphi 0, %s32
      %s54 = sphi 0, %s56
      %s57 = sphi 0, %s54
      %s58 = sphi 0, %s57
      %s74 = sphi 0, %s58
    $region4: #{tpu_custom_call.1} parent=1 // loop_header_branch
      %21 = sbr.rel (%p19) target = $region8
    $region5: #{tpu_custom_call.1} parent=1 // loop_body
      %s23 = ssub.s32 %s18, 1
      %s24 = ssub.s32 %s18, 2
      %s25 = sadd.s32 %s18, 1
      %s26 = ssub.s32 %s18, %s25
      %p27 = scmp.eq.s32.totalorder %s26, 0
      %s29 = sadd.s32 %s28, 1
      %s30 = scalar_select %p27, %s28, %s29
      %p33 = pneg %p27
      %p34 = scmp.eq.s32.totalorder %s18, 1
      %p35 = por %p33, %p34
      %p36 = scmp.ne.s32.totalorder %s28, %s31
      %p37 = scmp.eq.s32.totalorder %s18, 0
      %p38 = por %p36, %p37
      %p39 = scmp.ne.s32.totalorder %s28, %s31
      %p40 = scmp.eq.s32.totalorder %s23, 1
      %p41 = por %p39, %p40
      %p42 = scmp.ne.s32.totalorder %s31, %s32
      %p43 = scmp.eq.s32.totalorder %s23, 0
      %p44 = por %p42, %p43
      %p45 = scmp.ne.s32.totalorder %s31, %s32
      %p46 = scmp.eq.s32.totalorder %s24, 1
      %p47 = por %p45, %p46
      %p49 = scmp.ne.s32.totalorder %s32, %s48
      %p50 = scmp.eq.s32.totalorder %s24, 0
      %p51 = por %p49, %p50
      %s52 = ssub.s32 %s18, %s25
      %p53 = scmp.eq.s32.totalorder %s52, 0
      %s55 = sadd.s32 %s54, 1
      %s56 = scalar_select %p53, %s54, %s55
      %p59 = pneg %p53
      %p60 = scmp.eq.s32.totalorder %s18, 1
      %p61 = por %p59, %p60
      %p62 = scmp.ne.s32.totalorder %s54, %s57
      %p63 = scmp.eq.s32.totalorder %s18, 0
      %p64 = por %p62, %p63
      %p65 = scmp.ne.s32.totalorder %s54, %s57
      %p66 = scmp.eq.s32.totalorder %s23, 1
      %p67 = por %p65, %p66
      %p68 = scmp.ne.s32.totalorder %s57, %s58
      %p69 = scmp.eq.s32.totalorder %s23, 0
      %p70 = por %p68, %p69
      %p71 = scmp.ne.s32.totalorder %s57, %s58
      %p72 = scmp.eq.s32.totalorder %s24, 1
      %p73 = por %p71, %p72
      %p75 = scmp.ne.s32.totalorder %s58, %s74
      %p76 = scmp.eq.s32.totalorder %s24, 0
      %p77 = por %p75, %p76
      %p78 = scmp.le.s32.totalorder 1, %s18
      %p79 = scmp.lt.s32.totalorder %s18, 3
      %p80 = pnand %p78, %p79
      %p81 = pneg %p80
      // Predicated region
      $region9: #{tpu_custom_call.1} parent=5 // pred_check
        _
      $region10: #{tpu_custom_call.1} parent=5 // pred_check_branch
        %83 = sbr.rel (%p80) target = $region12
      $region11: #{tpu_custom_call.1} parent=5 // pred_region
        %s84 = ssub.s32 %s18, 1
      $region12: #{tpu_custom_call.1} parent=5 // pred_fallthru
        _
      %p85 = scmp.lt.s32.totalorder %s18, 2
      // Predicated region
      $region13: #{tpu_custom_call.1} parent=5 // pred_check
        %p86 = pneg %p85
      $region14: #{tpu_custom_call.1} parent=5 // pred_check_branch
        %88 = sbr.rel (%p86) target = $region16
      $region15: #{tpu_custom_call.1} parent=5 // pred_region
        // Predicated region
        $region17: #{tpu_custom_call.1} parent=15 // pred_check
          %p89 = pneg %p38
        $region18: #{tpu_custom_call.1} parent=15 // pred_check_branch
          %91 = sbr.rel (%p89) target = $region20
        $region19: #{tpu_custom_call.1} parent=15 // pred_region
          %s92 = sand.u32 %s28, 1
          %s93 = scalar_lea.sflag [#allocation5], %s92
          %s94 = sand.u32 %s28, 1
          %s95 = smul.addr %s94, 64
          %s96 = scalar_lea.vmem [#allocation4], %s95
          %s97 = smul.u32 8, %s18
          %s99 = ssub.s32 1024, 1024
          %100 = vsyncadd %s93, %s99
          %s101 = smul.addr %s97, 128
          %s102 = scalar_lea.hbm %s1, %s101
          %s103 = sshll.u32 %s96, 4
          %s104 = int_to_ptr.vmem [resolvable:$true] %s103
          %109 = dma.hbm_to_vmem [thread:$0]  %s102, 1024, %s104, %s93, 128, 128, 8
        $region20: #{tpu_custom_call.1} parent=15 // pred_fallthru
          _
      $region16: #{tpu_custom_call.1} parent=5 // pred_fallthru
        _
      %p110 = scmp.le.s32.totalorder 1, %s18
      %p111 = scmp.lt.s32.totalorder %s18, 3
      %p112 = pnand %p110, %p111
      %p113 = pneg %p112
      // Predicated region
      $region21: #{tpu_custom_call.1} parent=5 // pred_check
        _
      $region22: #{tpu_custom_call.1} parent=5 // pred_check_branch
        %115 = sbr.rel (%p112) target = $region24
      $region23: #{tpu_custom_call.1} parent=5 // pred_region
        %s116 = ssub.s32 %s18, 1
        %s117 = sand.u32 %s31, 1
        %s118 = scalar_lea.sflag [#allocation5], %s117
        %s119 = sand.u32 %s31, 1
        %s120 = smul.addr %s119, 64
        %s121 = scalar_lea.vmem [#allocation4], %s120
        // Predicated region
        $region25: #{tpu_custom_call.1} parent=23 // pred_check
          %p122 = pneg %p44
        $region26: #{tpu_custom_call.1} parent=23 // pred_check_branch
          %124 = sbr.rel (%p122) target = $region28
        $region27: #{tpu_custom_call.1} parent=23 // pred_region
          %125 = dma.done %s118, 1024
        $region28: #{tpu_custom_call.1} parent=23 // pred_fallthru
          _
        %s126 = sand.u32 %s31, 1
        %s127 = scalar_lea.sflag [#allocation5], %s126
        %s128 = sand.u32 %s31, 1
        %s129 = smul.addr %s128, 64
        %s130 = scalar_lea.vmem [#allocation4], %s129
        %p131 = pneg %p44
        %p132 = pneg %p41
        %p133 = pneg %p70
        %p134 = pneg %p67
        %s135 = sand.u32 %s57, 1
        %s136 = scalar_lea.sflag [#allocation6], %s135
        %s137 = sand.u32 %s57, 1
        %s138 = smul.addr %s137, 64
        %s139 = scalar_lea.vmem [#allocation7], %s138
        %s140 = smul.u32 8, %s23
        %s141 = smul.u32 8, %s23
        %v142 = vld [vmem:[%s121] sm:$0xff]
        %v143 = vld [vmem:[%s121 + $0x8] sm:$0xff]
        %v144 = vld [vmem:[%s121 + $0x10] sm:$0xff]
        %v145 = vld [vmem:[%s121 + $0x18] sm:$0xff]
        %v146 = vld [vmem:[%s121 + $0x20] sm:$0xff]
        %v147 = vld [vmem:[%s121 + $0x28] sm:$0xff]
        %v148 = vld [vmem:[%s121 + $0x30] sm:$0xff]
        %v149 = vld [vmem:[%s121 + $0x38] sm:$0xff]
        %v150 = vlaneseq
        %v151 = vshrl.u32 %v150, 7
        %v152 = vadd.s32 %v151, 8
        %v153 = vadd.s32 %v151, 16
        %v154 = vadd.s32 %v151, 24
        %v155 = vadd.s32 %v151, 32
        %v156 = vadd.s32 %v151, 40
        %v157 = vadd.s32 %v151, 48
        %v158 = vadd.s32 %v151, 56
        %vm159 = vcmp.lt.s32.totalorder %v151, 0
        %v160 = vsub.s32 0, %v151
        %v161 = vsel %vm159, %v160, %v151
        %v162 = vshrl.u32 %v161, 4
        %v163 = vand.u32 %v161, 15
        %v164 = vsub.s32 0, %v163
        %v165 = vsel %vm159, %v164, %v163
        %vm166 = vcmp.lt.s32.totalorder %v152, 0
        %v167 = vsub.s32 0, %v152
        %v168 = vsel %vm166, %v167, %v152
        %v169 = vshrl.u32 %v168, 4
        %v170 = vand.u32 %v168, 15
        %v171 = vsub.s32 0, %v170
        %v172 = vsel %vm166, %v171, %v170
        %vm173 = vcmp.lt.s32.totalorder %v153, 0
        %v174 = vsub.s32 0, %v153
        %v175 = vsel %vm173, %v174, %v153
        %v176 = vshrl.u32 %v175, 4
        %v177 = vand.u32 %v175, 15
        %v178 = vsub.s32 0, %v177
        %v179 = vsel %vm173, %v178, %v177
        %vm180 = vcmp.lt.s32.totalorder %v154, 0
        %v181 = vsub.s32 0, %v154
        %v182 = vsel %vm180, %v181, %v154
        %v183 = vshrl.u32 %v182, 4
        %v184 = vand.u32 %v182, 15
        %v185 = vsub.s32 0, %v184
        %v186 = vsel %vm180, %v185, %v184
        %vm187 = vcmp.lt.s32.totalorder %v155, 0
        %v188 = vsub.s32 0, %v155
        %v189 = vsel %vm187, %v188, %v155
        %v190 = vshrl.u32 %v189, 4
        %v191 = vand.u32 %v189, 15
        %v192 = vsub.s32 0, %v191
        %v193 = vsel %vm187, %v192, %v191
        %vm194 = vcmp.lt.s32.totalorder %v156, 0
        %v195 = vsub.s32 0, %v156
        %v196 = vsel %vm194, %v195, %v156
        %v197 = vshrl.u32 %v196, 4
        %v198 = vand.u32 %v196, 15
        %v199 = vsub.s32 0, %v198
        %v200 = vsel %vm194, %v199, %v198
        %vm201 = vcmp.lt.s32.totalorder %v157, 0
        %v202 = vsub.s32 0, %v157
        %v203 = vsel %vm201, %v202, %v157
        %v204 = vshrl.u32 %v203, 4
        %v205 = vand.u32 %v203, 15
        %v206 = vsub.s32 0, %v205
        %v207 = vsel %vm201, %v206, %v205
        %vm208 = vcmp.lt.s32.totalorder %v158, 0
        %v209 = vsub.s32 0, %v158
        %v210 = vsel %vm208, %v209, %v158
        %v211 = vshrl.u32 %v210, 4
        %v212 = vand.u32 %v210, 15
        %v213 = vsub.s32 0, %v212
        %v214 = vsel %vm208, %v213, %v212
        %vm215 = vcmp.ne.s32.totalorder %v165, 0
        %vm216 = vcmp.ne.s32.totalorder %v172, 0
        %vm217 = vcmp.ne.s32.totalorder %v179, 0
        %vm218 = vcmp.ne.s32.totalorder %v186, 0
        %vm219 = vcmp.ne.s32.totalorder %v193, 0
        %vm220 = vcmp.ne.s32.totalorder %v200, 0
        %vm221 = vcmp.ne.s32.totalorder %v207, 0
        %vm222 = vcmp.ne.s32.totalorder %v214, 0
        %vm223 = vcmp.lt.s32.totalorder %v165, 0
        %vm224 = vcmp.lt.s32.totalorder %v172, 0
        %vm225 = vcmp.lt.s32.totalorder %v179, 0
        %vm226 = vcmp.lt.s32.totalorder %v186, 0
        %vm227 = vcmp.lt.s32.totalorder %v193, 0
        %vm228 = vcmp.lt.s32.totalorder %v200, 0
        %vm229 = vcmp.lt.s32.totalorder %v207, 0
        %vm230 = vcmp.lt.s32.totalorder %v214, 0
        %vm231 = vmand %vm223, %vm215
        %vm232 = vmand %vm224, %vm216
        %vm233 = vmand %vm225, %vm217
        %vm234 = vmand %vm226, %vm218
        %vm235 = vmand %vm227, %vm219
        %vm236 = vmand %vm228, %vm220
        %vm237 = vmand %vm229, %vm221
        %vm238 = vmand %vm230, %vm222
        %v239 = vadd.s32 %v165, 16
        %v240 = vadd.s32 %v172, 16
        %v241 = vadd.s32 %v179, 16
        %v242 = vadd.s32 %v186, 16
        %v243 = vadd.s32 %v193, 16
        %v244 = vadd.s32 %v200, 16
        %v245 = vadd.s32 %v207, 16
        %v246 = vadd.s32 %v214, 16
        %v247 = vsel %vm231, %v239, %v165
        %v248 = vsel %vm232, %v240, %v172
        %v249 = vsel %vm233, %v241, %v179
        %v250 = vsel %vm234, %v242, %v186
        %v251 = vsel %vm235, %v243, %v193
        %v252 = vsel %vm236, %v244, %v200
        %v253 = vsel %vm237, %v245, %v207
        %v254 = vsel %vm238, %v246, %v214
        %v255 = vlaneseq
        %v256 = vand.u32 %v255, 127
        %s257 = sld [smem:[#allocation3]]
        %s258 = sld [smem:[#allocation3 + $0x1]]
        %s259 = sld [smem:[#allocation3 + $0x2]]
        %s260 = sld [smem:[#allocation3 + $0x3]]
        %s261 = sand.u32 %s260, 127
        %s262 = sand.u32 %s261, 127
        %263 = vrot.lane.b32.xlu0 %v142, %s262
        %v264 = vpop.permute.xlu0 %263
        %265 = vrot.lane.b32.xlu0 %v143, %s262
        %v266 = vpop.permute.xlu0 %265
        %267 = vrot.lane.b32.xlu0 %v144, %s262
        %v268 = vpop.permute.xlu0 %267
        %269 = vrot.lane.b32.xlu0 %v145, %s262
        %v270 = vpop.permute.xlu0 %269
        %271 = vrot.lane.b32.xlu0 %v146, %s262
        %v272 = vpop.permute.xlu0 %271
        %273 = vrot.lane.b32.xlu0 %v147, %s262
        %v274 = vpop.permute.xlu0 %273
        %275 = vrot.lane.b32.xlu0 %v148, %s262
        %v276 = vpop.permute.xlu0 %275
        %277 = vrot.lane.b32.xlu0 %v149, %s262
        %v278 = vpop.permute.xlu0 %277
        %s279 = sand.u32 %s259, 63
        %s280 = sand.u32 %s279, 7
        %s281 = sshrl.u32 %s279, 3
        %s282 = ssub.s32 8, %s280
        %v283 = vstv %s282
        %v284 = vrot.slane %v264, %v283
        %v285 = vstv %s282
        %v286 = vrot.slane %v266, %v285
        %v287 = vstv %s282
        %v288 = vrot.slane %v268, %v287
        %v289 = vstv %s282
        %v290 = vrot.slane %v270, %v289
        %v291 = vstv %s282
        %v292 = vrot.slane %v272, %v291
        %v293 = vstv %s282
        %v294 = vrot.slane %v274, %v293
        %v295 = vstv %s282
        %v296 = vrot.slane %v276, %v295
        %v297 = vstv %s282
        %v298 = vrot.slane %v278, %v297
        %v299 = vstv %s280
        %vm300 = vcmp.lt.s32.totalorder %v151, %v299
        %v301 = vsel %vm300, %v296, %v298
        %v302 = vsel %vm300, %v294, %v296
        %v303 = vsel %vm300, %v292, %v294
        %v304 = vsel %vm300, %v290, %v292
        %v305 = vsel %vm300, %v288, %v290
        %v306 = vsel %vm300, %v286, %v288
        %v307 = vsel %vm300, %v284, %v286
        %v308 = vsel %vm300, %v298, %v284
        %s309 = sand.u32 %s281, 1
        %v310 = vstv %s309
        %vm311 = vcmp.ne.s32.totalorder %v310, 0
        %v312 = vsel %vm311, %v301, %v308
        %v313 = vsel %vm311, %v308, %v307
        %v314 = vsel %vm311, %v307, %v306
        %v315 = vsel %vm311, %v306, %v305
        %v316 = vsel %vm311, %v305, %v304
        %v317 = vsel %vm311, %v304, %v303
        %v318 = vsel %vm311, %v303, %v302
        %v319 = vsel %vm311, %v302, %v301
        %s320 = sand.u32 %s281, 2
        %v321 = vstv %s320
        %vm322 = vcmp.ne.s32.totalorder %v321, 0
        %v323 = vsel %vm322, %v318, %v312
        %v324 = vsel %vm322, %v319, %v313
        %v325 = vsel %vm322, %v312, %v314
        %v326 = vsel %vm322, %v313, %v315
        %v327 = vsel %vm322, %v314, %v316
        %v328 = vsel %vm322, %v315, %v317
        %v329 = vsel %vm322, %v316, %v318
        %v330 = vsel %vm322, %v317, %v319
        %s331 = sand.u32 %s281, 4
        %v332 = vstv %s331
        %vm333 = vcmp.ne.s32.totalorder %v332, 0
        %v334 = vsel %vm333, %v327, %v323
        %v335 = vsel %vm333, %v328, %v324
        %v336 = vsel %vm333, %v329, %v325
        %v337 = vsel %vm333, %v330, %v326
        %v338 = vsel %vm333, %v323, %v327
        %v339 = vsel %vm333, %v324, %v328
        %v340 = vsel %vm333, %v325, %v329
        %v341 = vsel %vm333, %v326, %v330
        %v342 = vstv %s257
        %vm343 = vcmp.ge.s32.totalorder %v247, %v342
        %vm344 = vcmp.ge.s32.totalorder %v248, %v342
        %vm345 = vcmp.ge.s32.totalorder %v249, %v342
        %vm346 = vcmp.ge.s32.totalorder %v250, %v342
        %vm347 = vcmp.ge.s32.totalorder %v251, %v342
        %vm348 = vcmp.ge.s32.totalorder %v252, %v342
        %vm349 = vcmp.ge.s32.totalorder %v253, %v342
        %vm350 = vcmp.ge.s32.totalorder %v254, %v342
        %s351 = sadd.s32 %s257, 3
        %v352 = vstv %s351
        %vm353 = vcmp.lt.s32.totalorder %v247, %v352
        %vm354 = vcmp.lt.s32.totalorder %v248, %v352
        %vm355 = vcmp.lt.s32.totalorder %v249, %v352
        %vm356 = vcmp.lt.s32.totalorder %v250, %v352
        %vm357 = vcmp.lt.s32.totalorder %v251, %v352
        %vm358 = vcmp.lt.s32.totalorder %v252, %v352
        %vm359 = vcmp.lt.s32.totalorder %v253, %v352
        %vm360 = vcmp.lt.s32.totalorder %v254, %v352
        %vm361 = vmand %vm343, %vm353
        %vm362 = vmand %vm344, %vm354
        %vm363 = vmand %vm345, %vm355
        %vm364 = vmand %vm346, %vm356
        %vm365 = vmand %vm347, %vm357
        %vm366 = vmand %vm348, %vm358
        %vm367 = vmand %vm349, %vm359
        %vm368 = vmand %vm350, %vm360
        %v369 = vstv %s258
        %vm370 = vcmp.ge.s32.totalorder %v256, %v369
        %s371 = sadd.s32 %s258, 25
        %v372 = vstv %s371
        %vm373 = vcmp.lt.s32.totalorder %v256, %v372
        %vm374 = vmand %vm370, %vm373
        %v375 = vsel %vm361, 1, 0
        %v376 = vsel %vm362, 1, 0
        %v377 = vsel %vm363, 1, 0
        %v378 = vsel %vm364, 1, 0
        %v379 = vsel %vm365, 1, 0
        %v380 = vsel %vm366, 1, 0
        %v381 = vsel %vm367, 1, 0
        %v382 = vsel %vm368, 1, 0
        %vm383 = vcmp.eq.s32.totalorder %v375, 1
        %vm384 = vcmp.eq.s32.totalorder %v376, 1
        %vm385 = vcmp.eq.s32.totalorder %v377, 1
        %vm386 = vcmp.eq.s32.totalorder %v378, 1
        %vm387 = vcmp.eq.s32.totalorder %v379, 1
        %vm388 = vcmp.eq.s32.totalorder %v380, 1
        %vm389 = vcmp.eq.s32.totalorder %v381, 1
        %vm390 = vcmp.eq.s32.totalorder %v382, 1
        %v391 = vsel %vm374, 1, 0
        %vm392 = vcmp.eq.s32.totalorder %v391, 1
        %vm393 = vmand %vm383, %vm392
        %vm394 = vmand %vm384, %vm392
        %vm395 = vmand %vm385, %vm392
        %vm396 = vmand %vm386, %vm392
        %vm397 = vmand %vm387, %vm392
        %vm398 = vmand %vm388, %vm392
        %vm399 = vmand %vm389, %vm392
        %vm400 = vmand %vm390, %vm392
        %v401 = vsel %vm393, %v334, %v142
        %v402 = vsel %vm394, %v335, %v143
        %v403 = vsel %vm395, %v336, %v144
        %v404 = vsel %vm396, %v337, %v145
        %v405 = vsel %vm397, %v338, %v146
        %v406 = vsel %vm398, %v339, %v147
        %v407 = vsel %vm399, %v340, %v148
        %v408 = vsel %vm400, %v341, %v149
        %s409 = sld [smem:[#allocation3 + $0x4]]
        %s410 = sld [smem:[#allocation3 + $0x5]]
        %s411 = sld [smem:[#allocation3 + $0x6]]
        %s412 = sld [smem:[#allocation3 + $0x7]]
        %s413 = sand.u32 %s412, 127
        %s414 = sand.u32 %s413, 127
        %415 = vrot.lane.b32.xlu0 %v401, %s414
        %v416 = vpop.permute.xlu0 %415
        %417 = vrot.lane.b32.xlu0 %v402, %s414
        %v418 = vpop.permute.xlu0 %417
        %419 = vrot.lane.b32.xlu0 %v403, %s414
        %v420 = vpop.permute.xlu0 %419
        %421 = vrot.lane.b32.xlu0 %v404, %s414
        %v422 = vpop.permute.xlu0 %421
        %423 = vrot.lane.b32.xlu0 %v405, %s414
        %v424 = vpop.permute.xlu0 %423
        %425 = vrot.lane.b32.xlu0 %v406, %s414
        %v426 = vpop.permute.xlu0 %425
        %427 = vrot.lane.b32.xlu0 %v407, %s414
        %v428 = vpop.permute.xlu0 %427
        %429 = vrot.lane.b32.xlu0 %v408, %s414
        %v430 = vpop.permute.xlu0 %429
        %s431 = sand.u32 %s411, 63
        %s432 = sand.u32 %s431, 7
        %s433 = sshrl.u32 %s431, 3
        %s434 = ssub.s32 8, %s432
        %v435 = vstv %s434
        %v436 = vrot.slane %v416, %v435
        %v437 = vstv %s434
        %v438 = vrot.slane %v418, %v437
        %v439 = vstv %s434
        %v440 = vrot.slane %v420, %v439
        %v441 = vstv %s434
        %v442 = vrot.slane %v422, %v441
        %v443 = vstv %s434
        %v444 = vrot.slane %v424, %v443
        %v445 = vstv %s434
        %v446 = vrot.slane %v426, %v445
        %v447 = vstv %s434
        %v448 = vrot.slane %v428, %v447
        %v449 = vstv %s434
        %v450 = vrot.slane %v430, %v449
        %v451 = vstv %s432
        %vm452 = vcmp.lt.s32.totalorder %v151, %v451
        %v453 = vsel %vm452, %v448, %v450
        %v454 = vsel %vm452, %v446, %v448
        %v455 = vsel %vm452, %v444, %v446
        %v456 = vsel %vm452, %v442, %v444
        %v457 = vsel %vm452, %v440, %v442
        %v458 = vsel %vm452, %v438, %v440
        %v459 = vsel %vm452, %v436, %v438
        %v460 = vsel %vm452, %v450, %v436
        %s461 = sand.u32 %s433, 1
        %v462 = vstv %s461
        %vm463 = vcmp.ne.s32.totalorder %v462, 0
        %v464 = vsel %vm463, %v453, %v460
        %v465 = vsel %vm463, %v460, %v459
        %v466 = vsel %vm463, %v459, %v458
        %v467 = vsel %vm463, %v458, %v457
        %v468 = vsel %vm463, %v457, %v456
        %v469 = vsel %vm463, %v456, %v455
        %v470 = vsel %vm463, %v455, %v454
        %v471 = vsel %vm463, %v454, %v453
        %s472 = sand.u32 %s433, 2
        %v473 = vstv %s472
        %vm474 = vcmp.ne.s32.totalorder %v473, 0
        %v475 = vsel %vm474, %v470, %v464
        %v476 = vsel %vm474, %v471, %v465
        %v477 = vsel %vm474, %v464, %v466
        %v478 = vsel %vm474, %v465, %v467
        %v479 = vsel %vm474, %v466, %v468
        %v480 = vsel %vm474, %v467, %v469
        %v481 = vsel %vm474, %v468, %v470
        %v482 = vsel %vm474, %v469, %v471
        %s483 = sand.u32 %s433, 4
        %v484 = vstv %s483
        %vm485 = vcmp.ne.s32.totalorder %v484, 0
        %v486 = vsel %vm485, %v479, %v475
        %v487 = vsel %vm485, %v480, %v476
        %v488 = vsel %vm485, %v481, %v477
        %v489 = vsel %vm485, %v482, %v478
        %v490 = vsel %vm485, %v475, %v479
        %v491 = vsel %vm485, %v476, %v480
        %v492 = vsel %vm485, %v477, %v481
        %v493 = vsel %vm485, %v478, %v482
        %v494 = vstv %s409
        %vm495 = vcmp.ge.s32.totalorder %v247, %v494
        %vm496 = vcmp.ge.s32.totalorder %v248, %v494
        %vm497 = vcmp.ge.s32.totalorder %v249, %v494
        %vm498 = vcmp.ge.s32.totalorder %v250, %v494
        %vm499 = vcmp.ge.s32.totalorder %v251, %v494
        %vm500 = vcmp.ge.s32.totalorder %v252, %v494
        %vm501 = vcmp.ge.s32.totalorder %v253, %v494
        %vm502 = vcmp.ge.s32.totalorder %v254, %v494
        %s503 = sadd.s32 %s409, 3
        %v504 = vstv %s503
        %vm505 = vcmp.lt.s32.totalorder %v247, %v504
        %vm506 = vcmp.lt.s32.totalorder %v248, %v504
        %vm507 = vcmp.lt.s32.totalorder %v249, %v504
        %vm508 = vcmp.lt.s32.totalorder %v250, %v504
        %vm509 = vcmp.lt.s32.totalorder %v251, %v504
        %vm510 = vcmp.lt.s32.totalorder %v252, %v504
        %vm511 = vcmp.lt.s32.totalorder %v253, %v504
        %vm512 = vcmp.lt.s32.totalorder %v254, %v504
        %vm513 = vmand %vm495, %vm505
        %vm514 = vmand %vm496, %vm506
        %vm515 = vmand %vm497, %vm507
        %vm516 = vmand %vm498, %vm508
        %vm517 = vmand %vm499, %vm509
        %vm518 = vmand %vm500, %vm510
        %vm519 = vmand %vm501, %vm511
        %vm520 = vmand %vm502, %vm512
        %v521 = vstv %s410
        %vm522 = vcmp.ge.s32.totalorder %v256, %v521
        %s523 = sadd.s32 %s410, 25
        %v524 = vstv %s523
        %vm525 = vcmp.lt.s32.totalorder %v256, %v524
        %vm526 = vmand %vm522, %vm525
        %v527 = vsel %vm513, 1, 0
        %v528 = vsel %vm514, 1, 0
        %v529 = vsel %vm515, 1, 0
        %v530 = vsel %vm516, 1, 0
        %v531 = vsel %vm517, 1, 0
        %v532 = vsel %vm518, 1, 0
        %v533 = vsel %vm519, 1, 0
        %v534 = vsel %vm520, 1, 0
        %vm535 = vcmp.eq.s32.totalorder %v527, 1
        %vm536 = vcmp.eq.s32.totalorder %v528, 1
        %vm537 = vcmp.eq.s32.totalorder %v529, 1
        %vm538 = vcmp.eq.s32.totalorder %v530, 1
        %vm539 = vcmp.eq.s32.totalorder %v531, 1
        %vm540 = vcmp.eq.s32.totalorder %v532, 1
        %vm541 = vcmp.eq.s32.totalorder %v533, 1
        %vm542 = vcmp.eq.s32.totalorder %v534, 1
        %v543 = vsel %vm526, 1, 0
        %vm544 = vcmp.eq.s32.totalorder %v543, 1
        %vm545 = vmand %vm535, %vm544
        %vm546 = vmand %vm536, %vm544
        %vm547 = vmand %vm537, %vm544
        %vm548 = vmand %vm538, %vm544
        %vm549 = vmand %vm539, %vm544
        %vm550 = vmand %vm540, %vm544
        %vm551 = vmand %vm541, %vm544
        %vm552 = vmand %vm542, %vm544
        %v553 = vsel %vm545, %v486, %v401
        %v554 = vsel %vm546, %v487, %v402
        %v555 = vsel %vm547, %v488, %v403
        %v556 = vsel %vm548, %v489, %v404
        %v557 = vsel %vm549, %v490, %v405
        %v558 = vsel %vm550, %v491, %v406
        %v559 = vsel %vm551, %v492, %v407
        %v560 = vsel %vm552, %v493, %v408
        %s561 = sld [smem:[#allocation3 + $0x8]]
        %s562 = sld [smem:[#allocation3 + $0x9]]
        %s563 = sld [smem:[#allocation3 + $0xa]]
        %s564 = sld [smem:[#allocation3 + $0xb]]
        %s565 = sand.u32 %s564, 127
        %s566 = sand.u32 %s565, 127
        %567 = vrot.lane.b32.xlu0 %v553, %s566
        %v568 = vpop.permute.xlu0 %567
        %569 = vrot.lane.b32.xlu0 %v554, %s566
        %v570 = vpop.permute.xlu0 %569
        %571 = vrot.lane.b32.xlu0 %v555, %s566
        %v572 = vpop.permute.xlu0 %571
        %573 = vrot.lane.b32.xlu0 %v556, %s566
        %v574 = vpop.permute.xlu0 %573
        %575 = vrot.lane.b32.xlu0 %v557, %s566
        %v576 = vpop.permute.xlu0 %575
        %577 = vrot.lane.b32.xlu0 %v558, %s566
        %v578 = vpop.permute.xlu0 %577
        %579 = vrot.lane.b32.xlu0 %v559, %s566
        %v580 = vpop.permute.xlu0 %579
        %581 = vrot.lane.b32.xlu0 %v560, %s566
        %v582 = vpop.permute.xlu0 %581
        %s583 = sand.u32 %s563, 63
        %s584 = sand.u32 %s583, 7
        %s585 = sshrl.u32 %s583, 3
        %s586 = ssub.s32 8, %s584
        %v587 = vstv %s586
        %v588 = vrot.slane %v568, %v587
        %v589 = vstv %s586
        %v590 = vrot.slane %v570, %v589
        %v591 = vstv %s586
        %v592 = vrot.slane %v572, %v591
        %v593 = vstv %s586
        %v594 = vrot.slane %v574, %v593
        %v595 = vstv %s586
        %v596 = vrot.slane %v576, %v595
        %v597 = vstv %s586
        %v598 = vrot.slane %v578, %v597
        %v599 = vstv %s586
        %v600 = vrot.slane %v580, %v599
        %v601 = vstv %s586
        %v602 = vrot.slane %v582, %v601
        %v603 = vstv %s584
        %vm604 = vcmp.lt.s32.totalorder %v151, %v603
        %v605 = vsel %vm604, %v600, %v602
        %v606 = vsel %vm604, %v598, %v600
        %v607 = vsel %vm604, %v596, %v598
        %v608 = vsel %vm604, %v594, %v596
        %v609 = vsel %vm604, %v592, %v594
        %v610 = vsel %vm604, %v590, %v592
        %v611 = vsel %vm604, %v588, %v590
        %v612 = vsel %vm604, %v602, %v588
        %s613 = sand.u32 %s585, 1
        %v614 = vstv %s613
        %vm615 = vcmp.ne.s32.totalorder %v614, 0
        %v616 = vsel %vm615, %v605, %v612
        %v617 = vsel %vm615, %v612, %v611
        %v618 = vsel %vm615, %v611, %v610
        %v619 = vsel %vm615, %v610, %v609
        %v620 = vsel %vm615, %v609, %v608
        %v621 = vsel %vm615, %v608, %v607
        %v622 = vsel %vm615, %v607, %v606
        %v623 = vsel %vm615, %v606, %v605
        %s624 = sand.u32 %s585, 2
        %v625 = vstv %s624
        %vm626 = vcmp.ne.s32.totalorder %v625, 0
        %v627 = vsel %vm626, %v622, %v616
        %v628 = vsel %vm626, %v623, %v617
        %v629 = vsel %vm626, %v616, %v618
        %v630 = vsel %vm626, %v617, %v619
        %v631 = vsel %vm626, %v618, %v620
        %v632 = vsel %vm626, %v619, %v621
        %v633 = vsel %vm626, %v620, %v622
        %v634 = vsel %vm626, %v621, %v623
        %s635 = sand.u32 %s585, 4
        %v636 = vstv %s635
        %vm637 = vcmp.ne.s32.totalorder %v636, 0
        %v638 = vsel %vm637, %v631, %v627
        %v639 = vsel %vm637, %v632, %v628
        %v640 = vsel %vm637, %v633, %v629
        %v641 = vsel %vm637, %v634, %v630
        %v642 = vsel %vm637, %v627, %v631
        %v643 = vsel %vm637, %v628, %v632
        %v644 = vsel %vm637, %v629, %v633
        %v645 = vsel %vm637, %v630, %v634
        %v646 = vstv %s561
        %vm647 = vcmp.ge.s32.totalorder %v247, %v646
        %vm648 = vcmp.ge.s32.totalorder %v248, %v646
        %vm649 = vcmp.ge.s32.totalorder %v249, %v646
        %vm650 = vcmp.ge.s32.totalorder %v250, %v646
        %vm651 = vcmp.ge.s32.totalorder %v251, %v646
        %vm652 = vcmp.ge.s32.totalorder %v252, %v646
        %vm653 = vcmp.ge.s32.totalorder %v253, %v646
        %vm654 = vcmp.ge.s32.totalorder %v254, %v646
        %s655 = sadd.s32 %s561, 3
        %v656 = vstv %s655
        %vm657 = vcmp.lt.s32.totalorder %v247, %v656
        %vm658 = vcmp.lt.s32.totalorder %v248, %v656
        %vm659 = vcmp.lt.s32.totalorder %v249, %v656
        %vm660 = vcmp.lt.s32.totalorder %v250, %v656
        %vm661 = vcmp.lt.s32.totalorder %v251, %v656
        %vm662 = vcmp.lt.s32.totalorder %v252, %v656
        %vm663 = vcmp.lt.s32.totalorder %v253, %v656
        %vm664 = vcmp.lt.s32.totalorder %v254, %v656
        %vm665 = vmand %vm647, %vm657
        %vm666 = vmand %vm648, %vm658
        %vm667 = vmand %vm649, %vm659
        %vm668 = vmand %vm650, %vm660
        %vm669 = vmand %vm651, %vm661
        %vm670 = vmand %vm652, %vm662
        %vm671 = vmand %vm653, %vm663
        %vm672 = vmand %vm654, %vm664
        %v673 = vstv %s562
        %vm674 = vcmp.ge.s32.totalorder %v256, %v673
        %s675 = sadd.s32 %s562, 25
        %v676 = vstv %s675
        %vm677 = vcmp.lt.s32.totalorder %v256, %v676
        %vm678 = vmand %vm674, %vm677
        %v679 = vsel %vm665, 1, 0
        %v680 = vsel %vm666, 1, 0
        %v681 = vsel %vm667, 1, 0
        %v682 = vsel %vm668, 1, 0
        %v683 = vsel %vm669, 1, 0
        %v684 = vsel %vm670, 1, 0
        %v685 = vsel %vm671, 1, 0
        %v686 = vsel %vm672, 1, 0
        %vm687 = vcmp.eq.s32.totalorder %v679, 1
        %vm688 = vcmp.eq.s32.totalorder %v680, 1
        %vm689 = vcmp.eq.s32.totalorder %v681, 1
        %vm690 = vcmp.eq.s32.totalorder %v682, 1
        %vm691 = vcmp.eq.s32.totalorder %v683, 1
        %vm692 = vcmp.eq.s32.totalorder %v684, 1
        %vm693 = vcmp.eq.s32.totalorder %v685, 1
        %vm694 = vcmp.eq.s32.totalorder %v686, 1
        %v695 = vsel %vm678, 1, 0
        %vm696 = vcmp.eq.s32.totalorder %v695, 1
        %vm697 = vmand %vm687, %vm696
        %vm698 = vmand %vm688, %vm696
        %vm699 = vmand %vm689, %vm696
        %vm700 = vmand %vm690, %vm696
        %vm701 = vmand %vm691, %vm696
        %vm702 = vmand %vm692, %vm696
        %vm703 = vmand %vm693, %vm696
        %vm704 = vmand %vm694, %vm696
        %v705 = vsel %vm697, %v638, %v553
        %v706 = vsel %vm698, %v639, %v554
        %v707 = vsel %vm699, %v640, %v555
        %v708 = vsel %vm700, %v641, %v556
        %v709 = vsel %vm701, %v642, %v557
        %v710 = vsel %vm702, %v643, %v558
        %v711 = vsel %vm703, %v644, %v559
        %v712 = vsel %vm704, %v645, %v560
        %s713 = sld [smem:[#allocation3 + $0xc]]
        %s714 = sld [smem:[#allocation3 + $0xd]]
        %s715 = sld [smem:[#allocation3 + $0xe]]
        %s716 = sld [smem:[#allocation3 + $0xf]]
        %s717 = sand.u32 %s716, 127
        %s718 = sand.u32 %s717, 127
        %719 = vrot.lane.b32.xlu0 %v705, %s718
        %v720 = vpop.permute.xlu0 %719
        %721 = vrot.lane.b32.xlu0 %v706, %s718
        %v722 = vpop.permute.xlu0 %721
        %723 = vrot.lane.b32.xlu0 %v707, %s718
        %v724 = vpop.permute.xlu0 %723
        %725 = vrot.lane.b32.xlu0 %v708, %s718
        %v726 = vpop.permute.xlu0 %725
        %727 = vrot.lane.b32.xlu0 %v709, %s718
        %v728 = vpop.permute.xlu0 %727
        %729 = vrot.lane.b32.xlu0 %v710, %s718
        %v730 = vpop.permute.xlu0 %729
        %731 = vrot.lane.b32.xlu0 %v711, %s718
        %v732 = vpop.permute.xlu0 %731
        %733 = vrot.lane.b32.xlu0 %v712, %s718
        %v734 = vpop.permute.xlu0 %733
        %s735 = sand.u32 %s715, 63
        %s736 = sand.u32 %s735, 7
        %s737 = sshrl.u32 %s735, 3
        %s738 = ssub.s32 8, %s736
        %v739 = vstv %s738
        %v740 = vrot.slane %v720, %v739
        %v741 = vstv %s738
        %v742 = vrot.slane %v722, %v741
        %v743 = vstv %s738
        %v744 = vrot.slane %v724, %v743
        %v745 = vstv %s738
        %v746 = vrot.slane %v726, %v745
        %v747 = vstv %s738
        %v748 = vrot.slane %v728, %v747
        %v749 = vstv %s738
        %v750 = vrot.slane %v730, %v749
        %v751 = vstv %s738
        %v752 = vrot.slane %v732, %v751
        %v753 = vstv %s738
        %v754 = vrot.slane %v734, %v753
        %v755 = vstv %s736
        %vm756 = vcmp.lt.s32.totalorder %v151, %v755
        %v757 = vsel %vm756, %v752, %v754
        %v758 = vsel %vm756, %v750, %v752
        %v759 = vsel %vm756, %v748, %v750
        %v760 = vsel %vm756, %v746, %v748
        %v761 = vsel %vm756, %v744, %v746
        %v762 = vsel %vm756, %v742, %v744
        %v763 = vsel %vm756, %v740, %v742
        %v764 = vsel %vm756, %v754, %v740
        %s765 = sand.u32 %s737, 1
        %v766 = vstv %s765
        %vm767 = vcmp.ne.s32.totalorder %v766, 0
        %v768 = vsel %vm767, %v757, %v764
        %v769 = vsel %vm767, %v764, %v763
        %v770 = vsel %vm767, %v763, %v762
        %v771 = vsel %vm767, %v762, %v761
        %v772 = vsel %vm767, %v761, %v760
        %v773 = vsel %vm767, %v760, %v759
        %v774 = vsel %vm767, %v759, %v758
        %v775 = vsel %vm767, %v758, %v757
        %s776 = sand.u32 %s737, 2
        %v777 = vstv %s776
        %vm778 = vcmp.ne.s32.totalorder %v777, 0
        %v779 = vsel %vm778, %v774, %v768
        %v780 = vsel %vm778, %v775, %v769
        %v781 = vsel %vm778, %v768, %v770
        %v782 = vsel %vm778, %v769, %v771
        %v783 = vsel %vm778, %v770, %v772
        %v784 = vsel %vm778, %v771, %v773
        %v785 = vsel %vm778, %v772, %v774
        %v786 = vsel %vm778, %v773, %v775
        %s787 = sand.u32 %s737, 4
        %v788 = vstv %s787
        %vm789 = vcmp.ne.s32.totalorder %v788, 0
        %v790 = vsel %vm789, %v783, %v779
        %v791 = vsel %vm789, %v784, %v780
        %v792 = vsel %vm789, %v785, %v781
        %v793 = vsel %vm789, %v786, %v782
        %v794 = vsel %vm789, %v779, %v783
        %v795 = vsel %vm789, %v780, %v784
        %v796 = vsel %vm789, %v781, %v785
        %v797 = vsel %vm789, %v782, %v786
        %v798 = vstv %s713
        %vm799 = vcmp.ge.s32.totalorder %v247, %v798
        %vm800 = vcmp.ge.s32.totalorder %v248, %v798
        %vm801 = vcmp.ge.s32.totalorder %v249, %v798
        %vm802 = vcmp.ge.s32.totalorder %v250, %v798
        %vm803 = vcmp.ge.s32.totalorder %v251, %v798
        %vm804 = vcmp.ge.s32.totalorder %v252, %v798
        %vm805 = vcmp.ge.s32.totalorder %v253, %v798
        %vm806 = vcmp.ge.s32.totalorder %v254, %v798
        %s807 = sadd.s32 %s713, 3
        %v808 = vstv %s807
        %vm809 = vcmp.lt.s32.totalorder %v247, %v808
        %vm810 = vcmp.lt.s32.totalorder %v248, %v808
        %vm811 = vcmp.lt.s32.totalorder %v249, %v808
        %vm812 = vcmp.lt.s32.totalorder %v250, %v808
        %vm813 = vcmp.lt.s32.totalorder %v251, %v808
        %vm814 = vcmp.lt.s32.totalorder %v252, %v808
        %vm815 = vcmp.lt.s32.totalorder %v253, %v808
        %vm816 = vcmp.lt.s32.totalorder %v254, %v808
        %vm817 = vmand %vm799, %vm809
        %vm818 = vmand %vm800, %vm810
        %vm819 = vmand %vm801, %vm811
        %vm820 = vmand %vm802, %vm812
        %vm821 = vmand %vm803, %vm813
        %vm822 = vmand %vm804, %vm814
        %vm823 = vmand %vm805, %vm815
        %vm824 = vmand %vm806, %vm816
        %v825 = vstv %s714
        %vm826 = vcmp.ge.s32.totalorder %v256, %v825
        %s827 = sadd.s32 %s714, 25
        %v828 = vstv %s827
        %vm829 = vcmp.lt.s32.totalorder %v256, %v828
        %vm830 = vmand %vm826, %vm829
        %v831 = vsel %vm817, 1, 0
        %v832 = vsel %vm818, 1, 0
        %v833 = vsel %vm819, 1, 0
        %v834 = vsel %vm820, 1, 0
        %v835 = vsel %vm821, 1, 0
        %v836 = vsel %vm822, 1, 0
        %v837 = vsel %vm823, 1, 0
        %v838 = vsel %vm824, 1, 0
        %vm839 = vcmp.eq.s32.totalorder %v831, 1
        %vm840 = vcmp.eq.s32.totalorder %v832, 1
        %vm841 = vcmp.eq.s32.totalorder %v833, 1
        %vm842 = vcmp.eq.s32.totalorder %v834, 1
        %vm843 = vcmp.eq.s32.totalorder %v835, 1
        %vm844 = vcmp.eq.s32.totalorder %v836, 1
        %vm845 = vcmp.eq.s32.totalorder %v837, 1
        %vm846 = vcmp.eq.s32.totalorder %v838, 1
        %v847 = vsel %vm830, 1, 0
        %vm848 = vcmp.eq.s32.totalorder %v847, 1
        %vm849 = vmand %vm839, %vm848
        %vm850 = vmand %vm840, %vm848
        %vm851 = vmand %vm841, %vm848
        %vm852 = vmand %vm842, %vm848
        %vm853 = vmand %vm843, %vm848
        %vm854 = vmand %vm844, %vm848
        %vm855 = vmand %vm845, %vm848
        %vm856 = vmand %vm846, %vm848
        %v857 = vsel %vm849, %v790, %v705
        %v858 = vsel %vm850, %v791, %v706
        %v859 = vsel %vm851, %v792, %v707
        %v860 = vsel %vm852, %v793, %v708
        %v861 = vsel %vm853, %v794, %v709
        %v862 = vsel %vm854, %v795, %v710
        %v863 = vsel %vm855, %v796, %v711
        %v864 = vsel %vm856, %v797, %v712
        %865 = vst [vmem:[%s139] sm:$0xff] %v857
        %866 = vst [vmem:[%s139 + $0x8] sm:$0xff] %v858
        %867 = vst [vmem:[%s139 + $0x10] sm:$0xff] %v859
        %868 = vst [vmem:[%s139 + $0x18] sm:$0xff] %v860
        %869 = vst [vmem:[%s139 + $0x20] sm:$0xff] %v861
        %870 = vst [vmem:[%s139 + $0x28] sm:$0xff] %v862
        %871 = vst [vmem:[%s139 + $0x30] sm:$0xff] %v863
        %872 = vst [vmem:[%s139 + $0x38] sm:$0xff] %v864
        %s873 = sand.u32 %s57, 1
        %s874 = scalar_lea.sflag [#allocation6], %s873
        %s875 = sand.u32 %s57, 1
        %s876 = smul.addr %s875, 64
        %s877 = scalar_lea.vmem [#allocation7], %s876
        // Predicated region
        $region29: #{tpu_custom_call.1} parent=23 // pred_check
          %p878 = pneg %p67
        $region30: #{tpu_custom_call.1} parent=23 // pred_check_branch
          %880 = sbr.rel (%p878) target = $region32
        $region31: #{tpu_custom_call.1} parent=23 // pred_region
          %s881 = smul.u32 8, %s23
          %s883 = ssub.s32 1024, 1024
          %884 = vsyncadd %s874, %s883
          %s885 = smul.addr %s881, 128
          %s886 = scalar_lea.hbm %s2, %s885
          %s887 = sshll.u32 %s877, 4
          %s888 = int_to_ptr.vmem [resolvable:$true] %s887
          %893 = dma.vmem_to_hbm [thread:$0]  %s888, 1024, %s886, %s874, 128, 128, 8
        $region32: #{tpu_custom_call.1} parent=23 // pred_fallthru
          _
      $region24: #{tpu_custom_call.1} parent=5 // pred_fallthru
        _
      %p894 = scmp.le.s32.totalorder 2, %s18
      // Predicated region
      $region33: #{tpu_custom_call.1} parent=5 // pred_check
        %p895 = pneg %p894
      $region34: #{tpu_custom_call.1} parent=5 // pred_check_branch
        %897 = sbr.rel (%p895) target = $region36
      $region35: #{tpu_custom_call.1} parent=5 // pred_region
        %s898 = ssub.s32 %s18, 2
        // Predicated region
        $region37: #{tpu_custom_call.1} parent=35 // pred_check
          %p899 = pneg %p73
        $region38: #{tpu_custom_call.1} parent=35 // pred_check_branch
          %901 = sbr.rel (%p899) target = $region40
        $region39: #{tpu_custom_call.1} parent=35 // pred_region
          %s902 = sand.u32 %s58, 1
          %s903 = scalar_lea.sflag [#allocation6], %s902
          %s904 = sand.u32 %s58, 1
          %s905 = smul.addr %s904, 64
          %s906 = scalar_lea.vmem [#allocation7], %s905
          %907 = dma.done %s903, 1024
        $region40: #{tpu_custom_call.1} parent=35 // pred_fallthru
          _
      $region36: #{tpu_custom_call.1} parent=5 // pred_fallthru
        _
    $region6: #{tpu_custom_call.1} parent=1 // loop_footer
      %s22 = sadd.s32 1, %s18
    $region7: #{tpu_custom_call.1} parent=1 // loop_footer_branch
      %17 = sbr.rel target = $region3
    $region8: #{tpu_custom_call.1} parent=1 // loop_exit
      _
    %908 = vsyncpa [#allocation5], 1
    %s909 = scalar_lea.sflag [#allocation5], 1
    %910 = vsyncpa %s909, 1
    %911 = vsyncpa [#allocation6], 1
    %s912 = scalar_lea.sflag [#allocation6], 1
    %913 = vsyncpa %s912, 1

</llo_original>
